<compile_context>
chip_gen: v6e
topology: v6e:2x2x1
jax: 0.10.0
libtpu: 0.0.40
codegen_flags: <defaults>
</compile_context>

<pallas_src>
import jax
import jax.numpy as jnp
import numpy as np
from jax import lax
from jax.experimental import pallas as pl
from jax.experimental.pallas import tpu as pltpu

# ---------------- config (small, consistent with the module) ----------------
NUM_ENT = 128          # number of entities (lane-dense output)
NUM_REL = 4            # rel_embed has 2 * NUM_REL rows
GCN_DIM = 32           # embed_dim == gcn_dim (identity encoder)
NUM_FILT = 4           # p.num_filt_convd
KZ_H, KZ_W = 2, 3      # p.kz_h, p.kz_w
HOUT = 2 - KZ_H + 1
WOUT = GCN_DIM - KZ_W + 1
FLAT_SZ = HOUT * WOUT * NUM_FILT
B = 16                 # batch of (sub, rel) queries (single kernel invocation)
EPS = 1e-5

N_IDX = NUM_ENT + 2 * NUM_REL            # valid gather rows (sub | offset rel)
BIAS_ROW = N_IDX                         # constant row: conv bias + ones column
N_TAB_ROWS = ((N_IDX + 1 + 7) // 8) * 8  # sublane-aligned table height (144)
N_TAB_COLS = ((FLAT_SZ + 1 + 127) // 128) * 128  # lane-aligned conv width (128)


# ------------------------------- Pallas kernel -------------------------------
def convd_kernel(idx_ref, convtab_ref, fcw_ref, ent_t_ref, out_ref):
    # One-hot "gather + im2col" row selector: for each query b it picks the
    # pre-multiplied sub row, the (offset) rel row and the constant bias row.
    idx = idx_ref[...]                                          # (B, 2) int32
    col_ids = lax.broadcasted_iota(jnp.int32, (B, N_TAB_ROWS), 1)
    sel = (col_ids == idx[:, 0:1]) | (col_ids == idx[:, 1:2]) | (col_ids == BIAS_ROW)
    onehot = sel.astype(jnp.float32)                            # (B, N_TAB_ROWS)

    # gather + bn0 + conv + conv-bias + bn1 folded into one MXU matmul, relu.
    act = jnp.maximum(
        jnp.dot(onehot, convtab_ref[...], preferred_element_type=jnp.float32),
        0.0)                                                    # (B, N_TAB_COLS)

    # fc + bn2 (fc bias / bn2 shift enter via the always-one column), relu.
    h = jnp.maximum(
        jnp.dot(act, fcw_ref[...], preferred_element_type=jnp.float32),
        0.0)                                                    # (B, GCN_DIM)

    # scores = h @ ent_embed^T (entity table pre-transposed host-side).
    scores = jnp.dot(h, ent_t_ref[...], preferred_element_type=jnp.float32)
    out_ref[...] = jax.nn.sigmoid(scores)                       # (B, NUM_ENT)


def convd_forward(idx2, conv_tab, fcw_aug, ent_t):
    vmem = pl.BlockSpec(memory_space=pltpu.MemorySpace.VMEM)
    return pl.pallas_call(
        convd_kernel,
        out_shape=jax.ShapeDtypeStruct((B, NUM_ENT), jnp.float32),
        in_specs=[vmem,   # packed indices (B, 2) int32: [sub, NUM_ENT + rel]
                  vmem,   # folded gather+conv table (N_TAB_ROWS, N_TAB_COLS)
                  vmem,   # folded fc weight (+shift row) (N_TAB_COLS, GCN_DIM)
                  vmem],  # ent_embed^T (GCN_DIM, NUM_ENT)
        out_specs=vmem,
    )(idx2, conv_tab, fcw_aug, ent_t)


# ------------------------------ parameter setup ------------------------------
def init_params(key):
    ks = jax.random.split(key, 12)
    p = {}
    p["ent_embed"] = jax.random.normal(ks[0], (NUM_ENT, GCN_DIM), jnp.float32) * 0.1
    p["rel_embed"] = jax.random.normal(ks[1], (2 * NUM_REL, GCN_DIM), jnp.float32) * 0.1
    p["convw"] = jax.random.normal(ks[2], (NUM_FILT, 1, KZ_H, KZ_W), jnp.float32) * 0.2
    p["convb"] = jax.random.normal(ks[3], (NUM_FILT,), jnp.float32) * 0.1
    p["fcw"] = jax.random.normal(ks[4], (GCN_DIM, FLAT_SZ), jnp.float32) * 0.05
    p["fcb"] = jax.random.normal(ks[5], (GCN_DIM,), jnp.float32) * 0.1

    def bn(k, n):
        k1, k2, k3, k4 = jax.random.split(k, 4)
        gamma = 1.0 + 0.1 * jax.random.normal(k1, (n,), jnp.float32)
        beta = 0.1 * jax.random.normal(k2, (n,), jnp.float32)
        mean = 0.1 * jax.random.normal(k3, (n,), jnp.float32)
        var = 1.0 + 0.1 * jax.random.uniform(k4, (n,), jnp.float32)
        return gamma, beta, mean, var

    p["bn0"] = bn(ks[6], 1)
    p["bn1"] = bn(ks[7], NUM_FILT)
    p["bn2"] = bn(ks[8], GCN_DIM)
    return p


def fold_bn(bn):
    gamma, beta, mean, var = bn
    scale = gamma / jnp.sqrt(var + EPS)
    shift = beta - mean * scale
    return scale, shift


def fold_operands(p):
    """Host-side folding: bn0/convb/bn1 into an im2col conv slab fused with the
    [ent|rel] gather table; bn2/fcb into the fc slab; ent_embed pre-transposed."""
    s0, t0 = fold_bn(p["bn0"])      # (1,)
    s1, t1 = fold_bn(p["bn1"])      # (F,)
    s2, t2 = fold_bn(p["bn2"])      # (D,)

    convw = np.asarray(p["convw"])[:, 0]                              # (F, KH, KW)
    convw_fold = convw * float(s0[0]) * np.asarray(s1)[:, None, None]
    bias_fold = (np.asarray(s1) * (float(t0[0]) * convw.sum(axis=(1, 2))
                                   + np.asarray(p["convb"])) + np.asarray(t1))

    # Banded im2col weight: (2*D, FLAT_SZ); column (f, oh, ow) picks the
    # KZ_H x KZ_W window starting at row oh, lane ow of the [sub; rel] image.
    band = np.zeros((2 * GCN_DIM, FLAT_SZ), np.float32)
    for f in range(NUM_FILT):
        for oh in range(HOUT):
            for ow in range(WOUT):
                col = f * HOUT * WOUT + oh * WOUT + ow
                for kh in range(KZ_H):
                    for kw in range(KZ_W):
                        band[(oh + kh) * GCN_DIM + ow + kw, col] += convw_fold[f, kh, kw]

    # Block-diagonal gather table [ent | 0 ; 0 | rel], fused into the band.
    gtab = np.zeros((N_IDX, 2 * GCN_DIM), np.float32)
    gtab[:NUM_ENT, :GCN_DIM] = np.asarray(p["ent_embed"])
    gtab[NUM_ENT:, GCN_DIM:] = np.asarray(p["rel_embed"])
    core = gtab @ band                                                # (N_IDX, FLAT_SZ)

    conv_tab = np.zeros((N_TAB_ROWS, N_TAB_COLS), np.float32)
    conv_tab[:N_IDX, :FLAT_SZ] = core
    conv_tab[BIAS_ROW, :FLAT_SZ] = np.repeat(bias_fold, HOUT * WOUT)  # conv bias
    conv_tab[BIAS_ROW, FLAT_SZ] = 1.0            # ones column -> carries fc shift

    fcw_aug = np.zeros((N_TAB_COLS, GCN_DIM), np.float32)
    fcw_aug[:FLAT_SZ, :] = np.asarray(p["fcw"]).T * np.asarray(s2)[None, :]
    fcw_aug[FLAT_SZ, :] = np.asarray(p["fcb"]) * np.asarray(s2) + np.asarray(t2)

    ent_t = np.asarray(p["ent_embed"]).T                              # (D, NUM_ENT)
    return (jnp.asarray(conv_tab), jnp.asarray(fcw_aug), jnp.asarray(ent_t))


# ------------------------------ pure-JAX reference ---------------------------
def reference_forward(sub_idx, rel_idx, p):
    sub_emb = p["ent_embed"][sub_idx]
    rel_emb = p["rel_embed"][rel_idx]
    x = jnp.stack([sub_emb, rel_emb], axis=1)[:, None, :, :]  # (B,1,2,D) NCHW
    g0, b0, m0, v0 = p["bn0"]
    x = (x - m0) / jnp.sqrt(v0 + EPS) * g0 + b0
    x = lax.conv_general_dilated(x, p["convw"], (1, 1), "VALID",
                                 dimension_numbers=("NCHW", "OIHW", "NCHW"))
    x = x + p["convb"][None, :, None, None]
    g1, b1, m1, v1 = p["bn1"]
    x = ((x - m1[None, :, None, None]) / jnp.sqrt(v1 + EPS)[None, :, None, None]
         * g1[None, :, None, None] + b1[None, :, None, None])
    x = jnp.maximum(x, 0.0)
    x = x.reshape(x.shape[0], -1)                              # (B, FLAT_SZ)
    x = x @ p["fcw"].T + p["fcb"]
    g2, b2, m2, v2 = p["bn2"]
    x = (x - m2) / jnp.sqrt(v2 + EPS) * g2 + b2
    x = jnp.maximum(x, 0.0)
    return jax.nn.sigmoid(x @ p["ent_embed"].T)


# ----------------------------------- main ------------------------------------
if __name__ == "__main__":
    key = jax.random.PRNGKey(0)
    pkey, skey, rkey = jax.random.split(key, 3)
    params = init_params(pkey)

    sub_idx = jax.random.randint(skey, (B,), 0, NUM_ENT, dtype=jnp.int32)
    rel_idx = jax.random.randint(rkey, (B,), 0, 2 * NUM_REL, dtype=jnp.int32)

    conv_tab, fcw_aug, ent_t = fold_operands(params)
    idx2 = jnp.stack([sub_idx, rel_idx + NUM_ENT], axis=1).astype(jnp.int32)

    out = jax.block_until_ready(convd_forward(idx2, conv_tab, fcw_aug, ent_t))

    ref = jax.block_until_ready(reference_forward(sub_idx, rel_idx, params))
    np.testing.assert_allclose(np.asarray(out), np.asarray(ref),
                               rtol=2e-4, atol=2e-5)
    print("KERNEL_OK")
</pallas_src>

<mosaic_0001>
module attributes {stable_mosaic.version = 11 : i64} {
  func.func @convd_kernel(%arg0: memref<16x2xi32, #tpu.memory_space<vmem>>, %arg1: memref<144x128xf32, #tpu.memory_space<vmem>>, %arg2: memref<128x32xf32, #tpu.memory_space<vmem>>, %arg3: memref<32x128xf32, #tpu.memory_space<vmem>>, %arg4: memref<16x128xf32, #tpu.memory_space<vmem>>) attributes {dimension_semantics = [], scalar_prefetch = 0 : i64, scratch_operands = 0 : i64, tpu.core_type = #tpu.core_type<tc>} {
    %c0 = arith.constant 0 : index
    %c0_0 = arith.constant 0 : index
    %0 = vector.load %arg0[%c0, %c0_0] : memref<16x2xi32, #tpu.memory_space<vmem>>, vector<16x2xi32>
    %1 = tpu.iota {dimensions = array<i32: 1>} : vector<16x144xi32>
    %2 = vector.extract_strided_slice %0 {offsets = [0, 0], sizes = [16, 1], strides = [1, 1]} : vector<16x2xi32> to vector<16x1xi32>
    %3 = vector.broadcast %2 : vector<16x1xi32> to vector<16x144xi32>
    %4 = arith.cmpi eq, %1, %3 : vector<16x144xi32>
    %5 = vector.extract_strided_slice %0 {offsets = [0, 1], sizes = [16, 1], strides = [1, 1]} : vector<16x2xi32> to vector<16x1xi32>
    %6 = vector.broadcast %5 : vector<16x1xi32> to vector<16x144xi32>
    %7 = arith.cmpi eq, %1, %6 : vector<16x144xi32>
    %8 = arith.ori %4, %7 : vector<16x144xi1>
    %c136_i32 = arith.constant 136 : i32
    %9 = vector.broadcast %c136_i32 : i32 to vector<16x144xi32>
    %10 = arith.cmpi eq, %1, %9 : vector<16x144xi32>
    %11 = arith.ori %8, %10 : vector<16x144xi1>
    %12 = arith.extui %11 : vector<16x144xi1> to vector<16x144xi32>
    %13 = arith.sitofp %12 : vector<16x144xi32> to vector<16x144xf32>
    %c0_1 = arith.constant 0 : index
    %c0_2 = arith.constant 0 : index
    %14 = vector.load %arg1[%c0_1, %c0_2] : memref<144x128xf32, #tpu.memory_space<vmem>>, vector<144x128xf32>
    %cst = arith.constant dense<0.000000e+00> : vector<16x128xf32>
    %15 = tpu.matmul %13, %14, %cst {dimension_numbers = #tpu.dot_dimension_numbers<[1], [0], [0], [1], [0, 0, 1, 1], [], []>} : vector<16x144xf32>, vector<144x128xf32>, vector<16x128xf32> -> vector<16x128xf32>
    %cst_3 = arith.constant 0.000000e+00 : f32
    %16 = vector.broadcast %cst_3 : f32 to vector<16x128xf32>
    %17 = arith.maximumf %15, %16 : vector<16x128xf32>
    %c0_4 = arith.constant 0 : index
    %c0_5 = arith.constant 0 : index
    %18 = vector.load %arg2[%c0_4, %c0_5] : memref<128x32xf32, #tpu.memory_space<vmem>>, vector<128x32xf32>
    %cst_6 = arith.constant dense<0.000000e+00> : vector<16x32xf32>
    %19 = tpu.matmul %17, %18, %cst_6 {dimension_numbers = #tpu.dot_dimension_numbers<[1], [0], [0], [1], [0, 0, 1, 1], [], []>} : vector<16x128xf32>, vector<128x32xf32>, vector<16x32xf32> -> vector<16x32xf32>
    %cst_7 = arith.constant 0.000000e+00 : f32
    %20 = vector.broadcast %cst_7 : f32 to vector<16x32xf32>
    %21 = arith.maximumf %19, %20 : vector<16x32xf32>
    %c0_8 = arith.constant 0 : index
    %c0_9 = arith.constant 0 : index
    %22 = vector.load %arg3[%c0_8, %c0_9] : memref<32x128xf32, #tpu.memory_space<vmem>>, vector<32x128xf32>
    %cst_10 = arith.constant dense<0.000000e+00> : vector<16x128xf32>
    %23 = tpu.matmul %21, %22, %cst_10 {dimension_numbers = #tpu.dot_dimension_numbers<[1], [0], [0], [1], [0, 0, 1, 1], [], []>} : vector<16x32xf32>, vector<32x128xf32>, vector<16x128xf32> -> vector<16x128xf32>
    %24 = arith.negf %23 : vector<16x128xf32>
    %25 = math.exp %24 : vector<16x128xf32>
    %cst_11 = arith.constant 1.000000e+00 : f32
    %26 = vector.broadcast %cst_11 : f32 to vector<16x128xf32>
    %27 = arith.addf %26, %25 : vector<16x128xf32>
    %28 = arith.divf %26, %27 : vector<16x128xf32>
    %c0_12 = arith.constant 0 : index
    %c0_13 = arith.constant 0 : index
    %29 = vector.load %arg4[%c0_12, %c0_13] : memref<16x128xf32, #tpu.memory_space<vmem>>, vector<16x128xf32>
    tpu.vector_store %arg4[%c0_12, %c0_13], %28 {strides = array<i32>} : memref<16x128xf32, #tpu.memory_space<vmem>>, vector<16x128xf32>,
    return
  }
}

</mosaic_0001>

<llo_original>
// kernel: tpu_custom_call.1
$region0: #{tpu_custom_call.1}
  #allocation0 [shape = 'u32[]', space=smem, size = 0x4, offset = 0x4, fixed_abs, tag = 'smem constant byte address 0x4 - core index']
  #allocation1 [shape = 'u32[144,128]{1,0:T(1,128)}', space=vmem, size = 0x12000, scoped, tag = 'internal scratch']
  %s0 = inlined_call_operand.vmem [shape: s32[16,2], index: 0, kind: input, shape index: {}]
  %s1 = inlined_call_operand.vmem [shape: f32[144,128], index: 1, kind: input, shape index: {}]
  %s2 = inlined_call_operand.vmem [shape: f32[128,32], index: 2, kind: input, shape index: {}]
  %s3 = inlined_call_operand.vmem [shape: f32[32,128], index: 3, kind: input, shape index: {}]
  %s4 = inlined_call_operand.hbm [shape: f32[16,128], index: 4, kind: output, shape index: {}]
  %s5 = sld [smem:[#allocation0]]
  $region26: #{tpu_custom_call.1} parent=0
    _
  %s7 = ssub.s32 1, %s5
  %s8 = scalar_select 0, %s7, %s5
  $region1: #{tpu_custom_call.1} parent=0
    #allocation2 [shape = 'u8[8192]{0}', space=vmem, size = 0x2000, scoped, tag = 'output window, operand 0, single buffered']
    #allocation3 [shape = 's32[1]{0}', space=sflag, size = 0x4, scoped, tag = 'scoped memory for tpu_custom_call.1']
    %9 = vsyncpa [#allocation3], 0
    // Predicated region
    $region2: #{tpu_custom_call.1} parent=1 // pred_check
      _
    $region3: #{tpu_custom_call.1} parent=1 // pred_check_branch
      %11 = sbr.rel (0) target = $region5
    $region4: #{tpu_custom_call.1} parent=1 // pred_region
      _
    $region5: #{tpu_custom_call.1} parent=1 // pred_fallthru
      _
    // Predicated region
    $region6: #{tpu_custom_call.1} parent=1 // pred_check
      _
    $region7: #{tpu_custom_call.1} parent=1 // pred_check_branch
      %13 = sbr.rel (0) target = $region9
    $region8: #{tpu_custom_call.1} parent=1 // pred_region
      _
    $region9: #{tpu_custom_call.1} parent=1 // pred_fallthru
      _
    // Predicated region
    $region10: #{tpu_custom_call.1} parent=1 // pred_check
      _
    $region11: #{tpu_custom_call.1} parent=1 // pred_check_branch
      %15 = sbr.rel (0) target = $region13
    $region12: #{tpu_custom_call.1} parent=1 // pred_region
      _
    $region13: #{tpu_custom_call.1} parent=1 // pred_fallthru
      _
    // Predicated region
    $region14: #{tpu_custom_call.1} parent=1 // pred_check
      _
    $region15: #{tpu_custom_call.1} parent=1 // pred_check_branch
      %17 = sbr.rel (0) target = $region17
    $region16: #{tpu_custom_call.1} parent=1 // pred_region
      _
    $region17: #{tpu_custom_call.1} parent=1 // pred_fallthru
      _
    %v18 = vld [vmem:[%s0] sm:$0xff]
    %v19 = vld [vmem:[%s0 + $0x8] sm:$0xff]
    %v20 = vlaneseq
    %v21 = vand.u32 %v20, 127
    %v22 = vadd.s32 %v21, 128
    %23 = vset.pattern.permute.xlu0 0
    %24 = vperm.xlu0 %23, %v18
    %v25 = vpop.permute.xlu0 %24
    %26 = vset.pattern.permute.xlu0 0
    %27 = vperm.xlu0 %26, %v19
    %v28 = vpop.permute.xlu0 %27
    %vm29 = vcmp.eq.s32.totalorder %v21, %v25
    %vm30 = vcmp.eq.s32.totalorder %v22, %v25
    %vm31 = vcmp.eq.s32.totalorder %v21, %v28
    %vm32 = vcmp.eq.s32.totalorder %v22, %v28
    %33 = vset.pattern.permute.xlu0 1
    %34 = vperm.xlu0 %33, %v18
    %v35 = vpop.permute.xlu0 %34
    %36 = vset.pattern.permute.xlu0 1
    %37 = vperm.xlu0 %36, %v19
    %v38 = vpop.permute.xlu0 %37
    %vm39 = vcmp.eq.s32.totalorder %v21, %v35
    %vm40 = vcmp.eq.s32.totalorder %v22, %v35
    %vm41 = vcmp.eq.s32.totalorder %v21, %v38
    %vm42 = vcmp.eq.s32.totalorder %v22, %v38
    %vm43 = vmor %vm29, %vm39
    %vm44 = vmor %vm30, %vm40
    %vm45 = vmor %vm31, %vm41
    %vm46 = vmor %vm32, %vm42
    %vm47 = vcmp.eq.s32.totalorder %v21, 136
    %vm48 = vcmp.eq.s32.totalorder %v22, 136
    %vm49 = vmor %vm43, %vm47
    %vm50 = vmor %vm44, %vm48
    %vm51 = vmor %vm45, %vm47
    %vm52 = vmor %vm46, %vm48
    %v53 = vsel %vm49, 1, 0
    %v54 = vsel %vm50, 1, 0
    %v55 = vsel %vm51, 1, 0
    %v56 = vsel %vm52, 1, 0
    %v57 = vcvt.s32.f32 %v53
    %v58 = vcvt.s32.f32 %v54
    %v59 = vcvt.s32.f32 %v55
    %v60 = vcvt.s32.f32 %v56
    %v61 = vld [vmem:[%s1] sm:$0xff]
    %v62 = vld [vmem:[%s1 + $0x8] sm:$0xff]
    %v63 = vld [vmem:[%s1 + $0x10] sm:$0xff]
    %v64 = vld [vmem:[%s1 + $0x18] sm:$0xff]
    %v65 = vld [vmem:[%s1 + $0x20] sm:$0xff]
    %v66 = vld [vmem:[%s1 + $0x28] sm:$0xff]
    %v67 = vld [vmem:[%s1 + $0x30] sm:$0xff]
    %v68 = vld [vmem:[%s1 + $0x38] sm:$0xff]
    %v69 = vld [vmem:[%s1 + $0x40] sm:$0xff]
    %v70 = vld [vmem:[%s1 + $0x48] sm:$0xff]
    %v71 = vld [vmem:[%s1 + $0x50] sm:$0xff]
    %v72 = vld [vmem:[%s1 + $0x58] sm:$0xff]
    %v73 = vld [vmem:[%s1 + $0x60] sm:$0xff]
    %v74 = vld [vmem:[%s1 + $0x68] sm:$0xff]
    %v75 = vld [vmem:[%s1 + $0x70] sm:$0xff]
    %v76 = vld [vmem:[%s1 + $0x78] sm:$0xff]
    %v77 = vld [vmem:[%s1 + $0x80] sm:$0xff]
    %v78 = vld [vmem:[%s1 + $0x88] sm:$0xff]
    %vm79 = vcmask 130048
    %v81 = vsel %vm79, %v58, 0
    %v84 = vsel %vm79, %v60, 0
    %86 = vmatprep.subr.mxu0 0.0
    %87 = vmatpush1.msra.mxu0 %v76
    %88 = vmatprep.subr.mxu0 0.0
    %89 = vmatpush1.msra.mxu0 %v75
    %90 = vmatprep.subr.mxu0 0.0
    %91 = vmatpush1.msra.mxu0 %v74
    %92 = vmatprep.subr.mxu0 0.0
    %93 = vmatpush1.msra.mxu0 %v73
    %94 = vmatprep.subr.mxu0 0.0
    %95 = vmatpush1.msra.mxu0 %v72
    %96 = vmatprep.subr.mxu0 0.0
    %97 = vmatpush1.msra.mxu0 %v71
    %98 = vmatprep.subr.mxu0 0.0
    %99 = vmatpush1.msra.mxu0 %v70
    %100 = vmatprep.subr.mxu0 0.0
    %101 = vmatpush1.msra.mxu0 %v69
    %102 = vmatprep.subr.mxu0 0.0
    %103 = vmatpush1.msra.mxu0 %v68
    %104 = vmatprep.subr.mxu0 0.0
    %105 = vmatpush1.msra.mxu0 %v67
    %106 = vmatprep.subr.mxu0 0.0
    %107 = vmatpush1.msra.mxu0 %v66
    %108 = vmatprep.subr.mxu0 0.0
    %109 = vmatpush1.msra.mxu0 %v65
    %110 = vmatprep.subr.mxu0 0.0
    %111 = vmatpush1.msra.mxu0 %v64
    %112 = vmatprep.subr.mxu0 0.0
    %113 = vmatpush1.msra.mxu0 %v63
    %114 = vmatprep.subr.mxu0 0.0
    %115 = vmatpush1.msra.mxu0 %v62
    %116 = vmatprep.subr.mxu0 0.0
    %117 = vmatpush1.msra.mxu0 %v61
    %118 = vmatprep.subr.mxu0 0.0
    %119 = vmatpush2.msra.mxu0 0.0
    %120 = vmatprep.subr.mxu0 0.0
    %121 = vmatpush2.msra.mxu0 0.0
    %122 = vmatprep.subr.mxu0 0.0
    %123 = vmatpush2.msra.mxu0 0.0
    %124 = vmatprep.subr.mxu0 0.0
    %125 = vmatpush2.msra.mxu0 0.0
    %126 = vmatprep.subr.mxu0 0.0
    %127 = vmatpush2.msra.mxu0 0.0
    %128 = vmatprep.subr.mxu0 0.0
    %129 = vmatpush2.msra.mxu0 0.0
    %130 = vmatprep.subr.mxu0 0.0
    %131 = vmatpush2.msra.mxu0 0.0
    %132 = vmatprep.subr.mxu0 0.0
    %133 = vmatpush2.msra.mxu0 0.0
    %134 = vmatprep.subr.mxu0 0.0
    %135 = vmatpush2.msra.mxu0 0.0
    %136 = vmatprep.subr.mxu0 0.0
    %137 = vmatpush2.msra.mxu0 0.0
    %138 = vmatprep.subr.mxu0 0.0
    %139 = vmatpush2.msra.mxu0 0.0
    %140 = vmatprep.subr.mxu0 0.0
    %141 = vmatpush2.msra.mxu0 0.0
    %142 = vmatprep.subr.mxu0 0.0
    %143 = vmatpush2.msra.mxu0 0.0
    %144 = vmatprep.subr.mxu0 0.0
    %145 = vmatpush2.msra.mxu0 0.0
    %146 = vmatprep.subr.mxu0 0.0
    %147 = vmatpush2.msra.mxu0 %v78
    %148 = vmatprep.subr.mxu0 0.0
    %149 = vmatpush2.msra.mxu0 %v77
    %150 = vmatprep.mubr.f32.mxu0 %v81
    %151 = vmatmul.mubr.f32.gmra.mxu0 %v57
    %v152 = vpop.f32.mrf.mxu0
    %v153 = vadd.f32 0.0, %v152
    %v154 = vpop.f32.mrf.mxu0
    %155 = vmatprep.mubr.f32.mxu0 %v84
    %156 = vmatmul.mubr.f32.gmra.mxu0 %v59
    %v157 = vpop.f32.mrf.mxu0
    %v158 = vadd.f32 0.0, %v157
    %v159 = vpop.f32.mrf.mxu0
    %160 = vdwg.mxu0
    %v161 = vmax.f32 %v153, 0.0
    %v162 = vmax.f32 %v158, 0.0
    %v163 = vld [vmem:[%s2] sm:$0xff]
    %v164 = vld [vmem:[%s2 + $0x8] sm:$0xff]
    %v165 = vld [vmem:[%s2 + $0x10] sm:$0xff]
    %v166 = vld [vmem:[%s2 + $0x18] sm:$0xff]
    %v167 = vld [vmem:[%s2 + $0x20] sm:$0xff]
    %v168 = vld [vmem:[%s2 + $0x28] sm:$0xff]
    %v169 = vld [vmem:[%s2 + $0x30] sm:$0xff]
    %v170 = vld [vmem:[%s2 + $0x38] sm:$0xff]
    %v171 = vld [vmem:[%s2 + $0x40] sm:$0xff]
    %v172 = vld [vmem:[%s2 + $0x48] sm:$0xff]
    %v173 = vld [vmem:[%s2 + $0x50] sm:$0xff]
    %v174 = vld [vmem:[%s2 + $0x58] sm:$0xff]
    %v175 = vld [vmem:[%s2 + $0x60] sm:$0xff]
    %v176 = vld [vmem:[%s2 + $0x68] sm:$0xff]
    %v177 = vld [vmem:[%s2 + $0x70] sm:$0xff]
    %v178 = vld [vmem:[%s2 + $0x78] sm:$0xff]
    %179 = vmatprep.subr.mxu0 0.0
    %180 = vmatpush1.msra.mxu0 %v178
    %181 = vmatprep.subr.mxu0 0.0
    %182 = vmatpush1.msra.mxu0 %v177
    %183 = vmatprep.subr.mxu0 0.0
    %184 = vmatpush1.msra.mxu0 %v176
    %185 = vmatprep.subr.mxu0 0.0
    %186 = vmatpush1.msra.mxu0 %v175
    %187 = vmatprep.subr.mxu0 0.0
    %188 = vmatpush1.msra.mxu0 %v174
    %189 = vmatprep.subr.mxu0 0.0
    %190 = vmatpush1.msra.mxu0 %v173
    %191 = vmatprep.subr.mxu0 0.0
    %192 = vmatpush1.msra.mxu0 %v172
    %193 = vmatprep.subr.mxu0 0.0
    %194 = vmatpush1.msra.mxu0 %v171
    %195 = vmatprep.subr.mxu0 0.0
    %196 = vmatpush1.msra.mxu0 %v170
    %197 = vmatprep.subr.mxu0 0.0
    %198 = vmatpush1.msra.mxu0 %v169
    %199 = vmatprep.subr.mxu0 0.0
    %200 = vmatpush1.msra.mxu0 %v168
    %201 = vmatprep.subr.mxu0 0.0
    %202 = vmatpush1.msra.mxu0 %v167
    %203 = vmatprep.subr.mxu0 0.0
    %204 = vmatpush1.msra.mxu0 %v166
    %205 = vmatprep.subr.mxu0 0.0
    %206 = vmatpush1.msra.mxu0 %v165
    %207 = vmatprep.subr.mxu0 0.0
    %208 = vmatpush1.msra.mxu0 %v164
    %209 = vmatprep.subr.mxu0 0.0
    %210 = vmatpush1.msra.mxu0 %v163
    %211 = vmatprep.subr.mxu0 0.0
    %212 = vmatpush2.msra.mxu0 0.0
    %213 = vmatprep.subr.mxu0 0.0
    %214 = vmatpush2.msra.mxu0 0.0
    %215 = vmatprep.subr.mxu0 0.0
    %216 = vmatpush2.msra.mxu0 0.0
    %217 = vmatprep.subr.mxu0 0.0
    %218 = vmatpush2.msra.mxu0 0.0
    %219 = vmatprep.subr.mxu0 0.0
    %220 = vmatpush2.msra.mxu0 0.0
    %221 = vmatprep.subr.mxu0 0.0
    %222 = vmatpush2.msra.mxu0 0.0
    %223 = vmatprep.subr.mxu0 0.0
    %224 = vmatpush2.msra.mxu0 0.0
    %225 = vmatprep.subr.mxu0 0.0
    %226 = vmatpush2.msra.mxu0 0.0
    %227 = vmatprep.subr.mxu0 0.0
    %228 = vmatpush2.msra.mxu0 0.0
    %229 = vmatprep.subr.mxu0 0.0
    %230 = vmatpush2.msra.mxu0 0.0
    %231 = vmatprep.subr.mxu0 0.0
    %232 = vmatpush2.msra.mxu0 0.0
    %233 = vmatprep.subr.mxu0 0.0
    %234 = vmatpush2.msra.mxu0 0.0
    %235 = vmatprep.subr.mxu0 0.0
    %236 = vmatpush2.msra.mxu0 0.0
    %237 = vmatprep.subr.mxu0 0.0
    %238 = vmatpush2.msra.mxu0 0.0
    %239 = vmatprep.subr.mxu0 0.0
    %240 = vmatpush2.msra.mxu0 0.0
    %241 = vmatprep.subr.mxu0 0.0
    %242 = vmatpush2.msra.mxu0 0.0
    %243 = vmatprep.mubr.f32.mxu0 0.0
    %244 = vmatmul.mubr.f32.gmra.mxu0 %v161
    %v245 = vpop.f32.mrf.mxu0
    %v246 = vadd.f32 0.0, %v245
    %v247 = vpop.f32.mrf.mxu0
    %248 = vmatprep.mubr.f32.mxu0 0.0
    %249 = vmatmul.mubr.f32.gmra.mxu0 %v162
    %v250 = vpop.f32.mrf.mxu0
    %v251 = vadd.f32 0.0, %v250
    %v252 = vpop.f32.mrf.mxu0
    %253 = vdwg.mxu0
    %v254 = vmax.f32 %v246, 0.0
    %v255 = vmax.f32 %v251, 0.0
    %v256 = vld [vmem:[%s3] sm:$0xff]
    %v257 = vld [vmem:[%s3 + $0x8] sm:$0xff]
    %v258 = vld [vmem:[%s3 + $0x10] sm:$0xff]
    %v259 = vld [vmem:[%s3 + $0x18] sm:$0xff]
    %vm260 = vcmask 261120
    %v262 = vsel %vm260, %v254, 0
    %v265 = vsel %vm260, %v255, 0
    %267 = vmatprep.subr.mxu0 0.0
    %268 = vmatpush1.msra.mxu0 0.0
    %269 = vmatprep.subr.mxu0 0.0
    %270 = vmatpush1.msra.mxu0 0.0
    %271 = vmatprep.subr.mxu0 0.0
    %272 = vmatpush1.msra.mxu0 0.0
    %273 = vmatprep.subr.mxu0 0.0
    %274 = vmatpush1.msra.mxu0 0.0
    %275 = vmatprep.subr.mxu0 0.0
    %276 = vmatpush1.msra.mxu0 0.0
    %277 = vmatprep.subr.mxu0 0.0
    %278 = vmatpush1.msra.mxu0 0.0
    %279 = vmatprep.subr.mxu0 0.0
    %280 = vmatpush1.msra.mxu0 0.0
    %281 = vmatprep.subr.mxu0 0.0
    %282 = vmatpush1.msra.mxu0 0.0
    %283 = vmatprep.subr.mxu0 0.0
    %284 = vmatpush1.msra.mxu0 0.0
    %285 = vmatprep.subr.mxu0 0.0
    %286 = vmatpush1.msra.mxu0 0.0
    %287 = vmatprep.subr.mxu0 0.0
    %288 = vmatpush1.msra.mxu0 0.0
    %289 = vmatprep.subr.mxu0 0.0
    %290 = vmatpush1.msra.mxu0 0.0
    %291 = vmatprep.subr.mxu0 0.0
    %292 = vmatpush1.msra.mxu0 %v259
    %293 = vmatprep.subr.mxu0 0.0
    %294 = vmatpush1.msra.mxu0 %v258
    %295 = vmatprep.subr.mxu0 0.0
    %296 = vmatpush1.msra.mxu0 %v257
    %297 = vmatprep.subr.mxu0 0.0
    %298 = vmatpush1.msra.mxu0 %v256
    %299 = vmatprep.subr.mxu0 0.0
    %300 = vmatpush2.msra.mxu0 0.0
    %301 = vmatprep.subr.mxu0 0.0
    %302 = vmatpush2.msra.mxu0 0.0
    %303 = vmatprep.subr.mxu0 0.0
    %304 = vmatpush2.msra.mxu0 0.0
    %305 = vmatprep.subr.mxu0 0.0
    %306 = vmatpush2.msra.mxu0 0.0
    %307 = vmatprep.subr.mxu0 0.0
    %308 = vmatpush2.msra.mxu0 0.0
    %309 = vmatprep.subr.mxu0 0.0
    %310 = vmatpush2.msra.mxu0 0.0
    %311 = vmatprep.subr.mxu0 0.0
    %312 = vmatpush2.msra.mxu0 0.0
    %313 = vmatprep.subr.mxu0 0.0
    %314 = vmatpush2.msra.mxu0 0.0
    %315 = vmatprep.subr.mxu0 0.0
    %316 = vmatpush2.msra.mxu0 0.0
    %317 = vmatprep.subr.mxu0 0.0
    %318 = vmatpush2.msra.mxu0 0.0
    %319 = vmatprep.subr.mxu0 0.0
    %320 = vmatpush2.msra.mxu0 0.0
    %321 = vmatprep.subr.mxu0 0.0
    %322 = vmatpush2.msra.mxu0 0.0
    %323 = vmatprep.subr.mxu0 0.0
    %324 = vmatpush2.msra.mxu0 0.0
    %325 = vmatprep.subr.mxu0 0.0
    %326 = vmatpush2.msra.mxu0 0.0
    %327 = vmatprep.subr.mxu0 0.0
    %328 = vmatpush2.msra.mxu0 0.0
    %329 = vmatprep.subr.mxu0 0.0
    %330 = vmatpush2.msra.mxu0 0.0
    %331 = vmatprep.mubr.f32.mxu0 0.0
    %332 = vmatmul.mubr.f32.gmra.mxu0 %v262
    %v333 = vpop.f32.mrf.mxu0
    %v334 = vadd.f32 0.0, %v333
    %v335 = vpop.f32.mrf.mxu0
    %336 = vmatprep.mubr.f32.mxu0 0.0
    %337 = vmatmul.mubr.f32.gmra.mxu0 %v265
    %v338 = vpop.f32.mrf.mxu0
    %v339 = vadd.f32 0.0, %v338
    %v340 = vpop.f32.mrf.mxu0
    %341 = vdwg.mxu0
    %v342 = vxor.u32 %v334, 2147483648
    %v343 = vxor.u32 %v339, 2147483648
    %v344 = vmul.f32 %v342, 1.442695
    %v345 = vpow.pop %v344
    %v346 = vmul.f32 %v343, 1.442695
    %v347 = vpow.pop %v346
    %v348 = vadd.f32 %v345, 1.0
    %v349 = vadd.f32 %v347, 1.0
    %v350 = vrcp.pop %v348
    %v351 = vmul.f32 1.0, %v350
    %v352 = vrcp.pop %v349
    %v353 = vmul.f32 1.0, %v352
    %354 = vst [vmem:[#allocation2] sm:$0xff] %v351
    %355 = vst [vmem:[#allocation2 + $0x8] sm:$0xff] %v353
    // Predicated region
    $region18: #{tpu_custom_call.1} parent=1 // pred_check
      _
    $region19: #{tpu_custom_call.1} parent=1 // pred_check_branch
      %357 = sbr.rel (0) target = $region21
    $region20: #{tpu_custom_call.1} parent=1 // pred_region
      %s359 = ssub.s32 256, 256
      %360 = vsyncadd [#allocation3], %s359
      %s361 = sshll.u32 [#allocation2], 4
      %s362 = int_to_ptr.vmem [resolvable:$true] %s361
      %367 = dma.vmem_to_hbm [thread:$0]  %s362, 256, %s4, [#allocation3], 128, 128, 8
    $region21: #{tpu_custom_call.1} parent=1 // pred_fallthru
      _
    // Predicated region
    $region22: #{tpu_custom_call.1} parent=1 // pred_check
      _
    $region23: #{tpu_custom_call.1} parent=1 // pred_check_branch
      %369 = sbr.rel (0) target = $region25
    $region24: #{tpu_custom_call.1} parent=1 // pred_region
      %370 = dma.done [#allocation3], 256
    $region25: #{tpu_custom_call.1} parent=1 // pred_fallthru
      _
    %371 = vsyncpa [#allocation3], 1

</llo_original>
